<compile_context>
chip_gen: v5e
topology: v5e:2x2
jax: 0.10.0
libtpu: 0.0.40
codegen_flags: <defaults>
</compile_context>

<pallas_src>
import functools
import math

import jax
import jax.numpy as jnp
from jax.experimental import pallas as pl
from jax.experimental.pallas import tpu as pltpu


_MIN_PALLAS_BYTES = 2 * 1024 * 1024   # below this, fused XLA matvec wins


def _round_up(a, b):
    return ((a + b - 1) // b) * b


def _cdiv(a, b):
    return -(-a // b)


def _budgets():
    """Per-generation (x-pipeline byte budget, vmem_limit_bytes)."""
    try:
        vmem = int(pltpu.get_tpu_info().vmem_capacity_bytes)
    except Exception:
        vmem = 64 * 1024 * 1024           # conservative fallback (v7x-sized)
    if vmem <= 64 * 1024 * 1024:          # v7x: 64 MiB per TensorCore
        return 36 * 1024 * 1024, 48 * 1024 * 1024
    # v5e / v6e: 128 MiB physical VMEM (scoped default is much lower -> set it)
    return 64 * 1024 * 1024, 96 * 1024 * 1024


def _plan_tiles(n, e, itemsize, x_budget, tm=None, tk=None):
    """Pick (tm, tk, kpad). Byte-budgeted, lane-padding-conservative."""
    upcast = 4 if itemsize < 4 else 0     # in-kernel f32 upcast temp (single-buffered)

    def per_row(width):                   # VMEM bytes per x row at block width `width`
        lanes = _round_up(width, 128)     # conservative: minor dim padded to 128 lanes
        return lanes * (2 * itemsize + upcast)   # double-buffered input + upcast temp

    if tk is None:
        if e <= 128 or (x_budget // per_row(e)) >= 128:
            tk = e                        # full-E blocks, no K split
        else:
            # K-split: keep tm moderate, make tk as large as the budget allows.
            base_tm = 256
            tk = (x_budget // (base_tm * (2 * itemsize + upcast))) // 128 * 128
            tk = int(min(max(tk, 128), _round_up(e, 128)))

    if tm is None:
        tm = (x_budget // per_row(tk)) // 128 * 128
        tm = min(tm, _round_up(max(n, 1), 128))
        if n > 128:
            # Keep >= 2 row-steps so both v7x TensorCores get work; the extra
            # grid step is negligible on single-TC v5e/v6e.
            tm = min(tm, _round_up(_cdiv(n, 2), 128))
        tm = max(tm, 128)

    kpad = _round_up(e, tk)
    return int(tm), int(tk), int(kpad)


def _dense_kernel(x_ref, w_ref, b_ref, o_ref, *, e_total, tk, mask_k):
    # x_ref: (TM, TK) native dtype (VMEM)    w_ref: (1, TK) f32, zero-padded (VMEM)
    # b_ref: (1,)     f32 (SMEM)             o_ref: (1, TM) f32 (VMEM, lane-dense,
    #                                               resident across the K axis)
    k = pl.program_id(1)

    x = x_ref[...]
    if x.dtype != jnp.float32:
        # Matches torch `input.to(torch.float32)`; skipped for f32 inputs.
        x = x.astype(jnp.float32)
    if mask_k:
        # Ragged last K block: zero columns beyond the true embed size so
        # garbage-padded reads never contaminate the accumulation.
        col = jax.lax.broadcasted_iota(jnp.int32, x.shape, 1)
        x = jnp.where(k * tk + col < e_total, x, 0.0)

    # (1, TK) contracted with (TM, TK) -> (1, TM): w @ x.T on the MXU's
    # transposed-RHS path; no explicit transpose, lane-dense result row.
    part = jax.lax.dot_general(
        w_ref[...], x,
        dimension_numbers=(((1,), (1,)), ((), ())),
        preferred_element_type=jnp.float32,
    )

    @pl.when(k == 0)
    def _init():
        o_ref[...] = part + b_ref[0]

    @pl.when(k > 0)
    def _accumulate():
        o_ref[...] += part


@functools.partial(jax.jit, static_argnames=("tm", "tk", "vmem_limit"))
def _dense_flat(x_flat, w_pad, bias, *, tm, tk, vmem_limit):
    """x_flat: (N, E) float dtype; w_pad: (1, KPAD) f32; bias: (1,) f32 -> (N,) f32."""
    n, e = x_flat.shape
    kpad = w_pad.shape[1]
    grid_m = _cdiv(n, tm)
    grid_k = kpad // tk

    kernel = functools.partial(_dense_kernel, e_total=e, tk=tk, mask_k=(kpad != e))

    out = pl.pallas_call(
        kernel,
        out_shape=jax.ShapeDtypeStruct((1, n), jnp.float32),
        grid_spec=pltpu.PrefetchScalarGridSpec(
            num_scalar_prefetch=0,
            grid=(grid_m, grid_k),
            in_specs=[
                pl.BlockSpec((tm, tk), lambda i, k: (i, k)),             # x tile
                pl.BlockSpec((1, tk), lambda i, k: (0, k)),              # weight tile
                pl.BlockSpec(memory_space=pltpu.MemorySpace.SMEM),       # bias scalar
            ],
            out_specs=pl.BlockSpec((1, tm), lambda i, k: (0, i)),        # lane-dense
        ),
        compiler_params=pltpu.CompilerParams(
            dimension_semantics=("parallel", "arbitrary"),
            vmem_limit_bytes=vmem_limit,
        ),
    )(x_flat, w_pad, bias)
    return out[0]


def dense_layer_forward(x, weight, bias, *, tm=None, tk=None,
                        min_pallas_bytes=_MIN_PALLAS_BYTES):
    """Reproduces DenseLayer.forward: cast to f32 -> Linear(E, 1) -> squeeze()."""
    lead_shape = x.shape[:-1]
    e = x.shape[-1]
    n = int(math.prod(lead_shape)) if lead_shape else 1

    if not jnp.issubdtype(x.dtype, jnp.floating):
        x = x.astype(jnp.float32)
    x_flat = x.reshape(n, e)
    weight = jnp.asarray(weight, jnp.float32).reshape(1, e)
    bias = jnp.asarray(bias, jnp.float32).reshape(1)

    if n * e * x_flat.dtype.itemsize < min_pallas_bytes:
        # Tiny-problem path: fused XLA matvec, no pallas_call launch overhead.
        out_flat = (x_flat.astype(jnp.float32) @ weight.T)[:, 0] + bias[0]
    else:
        x_budget, vmem_limit = _budgets()
        tm_, tk_, kpad = _plan_tiles(n, e, x_flat.dtype.itemsize, x_budget,
                                     tm=tm, tk=tk)
        w_pad = weight if kpad == e else jnp.pad(weight, ((0, 0), (0, kpad - e)))
        out_flat = _dense_flat(x_flat, w_pad, bias,
                               tm=tm_, tk=tk_, vmem_limit=vmem_limit)   # (N,) f32

    out = out_flat.reshape(lead_shape + (1,))
    # torch.squeeze(): drop all size-1 dims.
    squeeze_axes = tuple(i for i, s in enumerate(out.shape) if s == 1)
    return jnp.squeeze(out, axis=squeeze_axes)


def init_dense_params(key, embed_size):
    """Deterministic init matching nn.Linear(embed_size, 1) shapes/scales."""
    kw, kb = jax.random.split(key)
    bound = 1.0 / math.sqrt(embed_size)
    weight = jax.random.uniform(
        kw, (1, embed_size), jnp.float32, minval=-bound, maxval=bound
    )
    bias = jax.random.uniform(kb, (1,), jnp.float32, minval=-bound, maxval=bound)
    return weight, bias


if __name__ == "__main__":
    embed_size = 32
    batch, seq = 2, 8

    key = jax.random.PRNGKey(0)
    k_x, k_p, k_x2, k_p2 = jax.random.split(key, 4)
    weight, bias = init_dense_params(k_p, embed_size)

    # 1) Small input, Pallas path forced (default dispatch routes tiny inputs
    #    to the XLA fallback).
    x = jax.random.normal(k_x, (batch, seq, embed_size), dtype=jnp.float32)
    out = jax.block_until_ready(
        dense_layer_forward(x, weight, bias, min_pallas_bytes=0))
    ref = jnp.squeeze(x @ weight.T + bias, axis=-1)
    assert out.shape == (batch, seq), out.shape
    assert jnp.allclose(out, ref, atol=1e-4, rtol=1e-4)

    # 2) Ragged row count + multi-step row grid (megacore-friendly grid_m >= 2).
    x2 = jax.random.normal(k_x2, (5, 500, embed_size), dtype=jnp.float32)
    out2 = jax.block_until_ready(
        dense_layer_forward(x2, weight, bias, min_pallas_bytes=0))
    ref2 = jnp.squeeze(x2 @ weight.T + bias, axis=-1)
    assert out2.shape == (5, 500), out2.shape
    assert jnp.allclose(out2, ref2, atol=1e-4, rtol=1e-4)

    # 3) bf16 activations: native dtype on the wire, in-kernel f32 upcast.
    x3 = x2.astype(jnp.bfloat16)
    out3 = jax.block_until_ready(
        dense_layer_forward(x3, weight, bias, min_pallas_bytes=0))
    ref3 = jnp.squeeze(x3.astype(jnp.float32) @ weight.T + bias, axis=-1)
    assert out3.shape == (5, 500), out3.shape
    assert jnp.allclose(out3, ref3, atol=1e-3, rtol=1e-3)

    # 4) K-split code path exercised at small scale (E=160 not a multiple of
    #    tk=128): padded weight, in-kernel column masking, accumulation over K.
    embed2 = 160
    weight2, bias2 = init_dense_params(k_p2, embed2)
    x4 = jax.random.normal(jax.random.fold_in(key, 7), (3, 300, embed2),
                           dtype=jnp.float32)
    out4 = jax.block_until_ready(
        dense_layer_forward(x4, weight2, bias2, tk=128, min_pallas_bytes=0))
    ref4 = jnp.squeeze(x4 @ weight2.T + bias2, axis=-1)
    assert out4.shape == (3, 300), out4.shape
    assert jnp.allclose(out4, ref4, atol=1e-3, rtol=1e-3)

    # 5) Default dispatch (tiny input -> fused XLA fallback path).
    out5 = jax.block_until_ready(dense_layer_forward(x, weight, bias))
    assert jnp.allclose(out5, ref, atol=1e-4, rtol=1e-4)

    print("KERNEL_OK")
</pallas_src>

<mosaic_0001>
module attributes {stable_mosaic.version = 11 : i64} {
  func.func @_dense_kernel(%arg0: i32, %arg1: i32, %arg2: memref<128x32xf32, #tpu.memory_space<vmem>>, %arg3: memref<1x32xf32, #tpu.memory_space<vmem>>, %arg4: memref<1xf32, #tpu.memory_space<smem>>, %arg5: memref<1x128xf32, #tpu.memory_space<vmem>>) attributes {dimension_semantics = [#tpu.dimension_semantics<parallel>, #tpu.dimension_semantics<arbitrary>], iteration_bounds = array<i64: 1, 1>, scalar_prefetch = 0 : i64, scratch_operands = 0 : i64, tpu.core_type = #tpu.core_type<tc>, window_params = [{transform_indices = @transform_0, window_bounds = array<i64: 128, 32>}, {transform_indices = @transform_1, window_bounds = array<i64: 1, 32>}, {transform_indices = @transform_2, window_bounds = array<i64: 1>}, {transform_indices = @transform_3, window_bounds = array<i64: 1, 128>}]} {
    %c0 = arith.constant 0 : index
    %c0_0 = arith.constant 0 : index
    %0 = vector.load %arg2[%c0, %c0_0] : memref<128x32xf32, #tpu.memory_space<vmem>>, vector<128x32xf32>
    %c0_1 = arith.constant 0 : index
    %c0_2 = arith.constant 0 : index
    %1 = vector.load %arg3[%c0_1, %c0_2] : memref<1x32xf32, #tpu.memory_space<vmem>>, vector<1x32xf32>
    %cst = arith.constant dense<0.000000e+00> : vector<1x128xf32>
    %2 = tpu.matmul %1, %0, %cst {dimension_numbers = #tpu.dot_dimension_numbers<[1], [1], [0], [0], [0, 0, 1, 0], [], []>} : vector<1x32xf32>, vector<128x32xf32>, vector<1x128xf32> -> vector<1x128xf32>
    %c0_i32 = arith.constant 0 : i32
    %3 = arith.cmpi eq, %arg1, %c0_i32 : i32
    %4 = arith.extui %3 : i1 to i32
    %c0_i32_3 = arith.constant 0 : i32
    %5 = arith.cmpi ne, %4, %c0_i32_3 : i32
    scf.if %5 {
      %c0_6 = arith.constant 0 : index
      %9 = memref.load %arg4[%c0_6] : memref<1xf32, #tpu.memory_space<smem>>
      %10 = vector.broadcast %9 : f32 to vector<1x128xf32>
      %11 = arith.addf %2, %10 : vector<1x128xf32>
      %c0_7 = arith.constant 0 : index
      %c0_8 = arith.constant 0 : index
      %12 = vector.load %arg5[%c0_7, %c0_8] : memref<1x128xf32, #tpu.memory_space<vmem>>, vector<1x128xf32>
      tpu.vector_store %arg5[%c0_7, %c0_8], %11 {strides = array<i32>} : memref<1x128xf32, #tpu.memory_space<vmem>>, vector<1x128xf32>,
    } else {
    }
    %c0_i32_4 = arith.constant 0 : i32
    %6 = arith.cmpi sgt, %arg1, %c0_i32_4 : i32
    %7 = arith.extui %6 : i1 to i32
    %c0_i32_5 = arith.constant 0 : i32
    %8 = arith.cmpi ne, %7, %c0_i32_5 : i32
    scf.if %8 {
      %c0_6 = arith.constant 0 : index
      %c0_7 = arith.constant 0 : index
      %9 = vector.load %arg5[%c0_6, %c0_7] : memref<1x128xf32, #tpu.memory_space<vmem>>, vector<1x128xf32>
      %10 = arith.addf %9, %2 : vector<1x128xf32>
      %c0_8 = arith.constant 0 : index
      %c0_9 = arith.constant 0 : index
      %11 = vector.load %arg5[%c0_8, %c0_9] : memref<1x128xf32, #tpu.memory_space<vmem>>, vector<1x128xf32>
      tpu.vector_store %arg5[%c0_8, %c0_9], %10 {strides = array<i32>} : memref<1x128xf32, #tpu.memory_space<vmem>>, vector<1x128xf32>,
    } else {
    }
    return
  }
  func.func @transform_0(%arg0: i32, %arg1: i32) -> (i32, i32) {
    %c0_i32 = arith.constant 0 : i32
    return %arg0, %arg1 : i32, i32
  }
  func.func @transform_1(%arg0: i32, %arg1: i32) -> (i32, i32) {
    %c0_i32 = arith.constant 0 : i32
    %c0_i32_0 = arith.constant 0 : i32
    return %c0_i32, %arg1 : i32, i32
  }
  func.func @transform_2(%arg0: i32, %arg1: i32) -> i32 {
    %c0_i32 = arith.constant 0 : i32
    %c0_i32_0 = arith.constant 0 : i32
    return %c0_i32 : i32
  }
  func.func @transform_3(%arg0: i32, %arg1: i32) -> (i32, i32) {
    %c0_i32 = arith.constant 0 : i32
    %c0_i32_0 = arith.constant 0 : i32
    return %c0_i32, %arg0 : i32, i32
  }
}

</mosaic_0001>

<llo_original>
// kernel: _dense_flat.1
$region0: #{_dense_flat.1}
  #allocation0 [shape = 'u32[]', space=smem, size = 0x4, offset = 0x4, fixed_abs, tag = 'smem constant byte address 0x4 - core index']
  #allocation1 [shape = 'u32[72,128]{1,0:T(1,128)}', space=vmem, size = 0x9000, scoped, tag = 'internal scratch']
  #allocation2 [shape = 'f32[1]{0:T(128)S(6)}', space=smem, size = 0x200, scoped, tag = 'scoped memory for _dense_flat.1']
  %s0 = inlined_call_operand.hbm [shape: f32[16,32], index: 0, kind: input, shape index: {}]
  %s1 = inlined_call_operand.vmem [shape: f32[1,32], index: 1, kind: input, shape index: {}]
  %s2 = inlined_call_operand.<no memory space> [shape: f32[1], index: 2, kind: input, shape index: {}]
  %s3 = inlined_call_operand.hbm [shape: f32[1,16], index: 3, kind: output, shape index: {}]
  %s4 = sld [smem:[#allocation0]]
  $region34: #{_dense_flat.1} parent=0
    _
  %s6 = ssub.s32 1, %s4
  %s7 = scalar_select 0, %s6, %s4
  %8 = sst [smem:[#allocation2]] %s2
  $region1: #{_dense_flat.1} parent=0
    #allocation3 [shape = 'u8[65536]{0}', space=vmem, size = 0x10000, scoped, tag = 'input window, operand 0, single buffered']
    #allocation4 [shape = 's32[1]{0}', space=sflag, size = 0x4, scoped, tag = 'scoped memory for _dense_flat.1']
    #allocation5 [shape = 's32[1]{0}', space=sflag, size = 0x4, scoped, tag = 'scoped memory for _dense_flat.1']
    #allocation6 [shape = 'u8[512]{0}', space=vmem, size = 0x400, scoped, tag = 'output window, operand 0, single buffered']
    %9 = vsyncpa [#allocation4], 0
    %10 = vsyncpa [#allocation5], 0
    // Predicated region
    $region2: #{_dense_flat.1} parent=1 // pred_check
      _
    $region3: #{_dense_flat.1} parent=1 // pred_check_branch
      %12 = sbr.rel (0) target = $region5
    $region4: #{_dense_flat.1} parent=1 // pred_region
      %14 = vsyncadd [#allocation4], 1792
      %s15 = sshll.u32 %s0, 4
      %s16 = int_to_ptr.hbm [resolvable:$true] %s15
      %s17 = sshll.u32 [#allocation3], 4
      %s18 = int_to_ptr.vmem [resolvable:$true] %s17
      %23 = dma.hbm_to_vmem [thread:$0]  %s16, 256, %s18, [#allocation4], 128, 128, 8
    $region5: #{_dense_flat.1} parent=1 // pred_fallthru
      _
    // Predicated region
    $region6: #{_dense_flat.1} parent=1 // pred_check
      _
    $region7: #{_dense_flat.1} parent=1 // pred_check_branch
      %25 = sbr.rel (0) target = $region9
    $region8: #{_dense_flat.1} parent=1 // pred_region
      _
    $region9: #{_dense_flat.1} parent=1 // pred_fallthru
      _
    // Predicated region
    $region10: #{_dense_flat.1} parent=1 // pred_check
      _
    $region11: #{_dense_flat.1} parent=1 // pred_check_branch
      %27 = sbr.rel (0) target = $region13
    $region12: #{_dense_flat.1} parent=1 // pred_region
      _
    $region13: #{_dense_flat.1} parent=1 // pred_fallthru
      _
    // Predicated region
    $region14: #{_dense_flat.1} parent=1 // pred_check
      _
    $region15: #{_dense_flat.1} parent=1 // pred_check_branch
      %29 = sbr.rel (0) target = $region17
    $region16: #{_dense_flat.1} parent=1 // pred_region
      %31 = dma.done [#allocation4], 2048
    $region17: #{_dense_flat.1} parent=1 // pred_fallthru
      _
    %v32 = vld [vmem:[#allocation3] sm:$0xff]
    %v33 = vld [vmem:[#allocation3 + $0x8] sm:$0xff]
    %v34 = vld [vmem:[#allocation3 + $0x10] sm:$0xff]
    %v35 = vld [vmem:[#allocation3 + $0x18] sm:$0xff]
    %v36 = vld [vmem:[#allocation3 + $0x20] sm:$0xff]
    %v37 = vld [vmem:[#allocation3 + $0x28] sm:$0xff]
    %v38 = vld [vmem:[#allocation3 + $0x30] sm:$0xff]
    %v39 = vld [vmem:[#allocation3 + $0x38] sm:$0xff]
    %v40 = vld [vmem:[#allocation3 + $0x40] sm:$0xff]
    %v41 = vld [vmem:[#allocation3 + $0x48] sm:$0xff]
    %v42 = vld [vmem:[#allocation3 + $0x50] sm:$0xff]
    %v43 = vld [vmem:[#allocation3 + $0x58] sm:$0xff]
    %v44 = vld [vmem:[#allocation3 + $0x60] sm:$0xff]
    %v45 = vld [vmem:[#allocation3 + $0x68] sm:$0xff]
    %v46 = vld [vmem:[#allocation3 + $0x70] sm:$0xff]
    %v47 = vld [vmem:[#allocation3 + $0x78] sm:$0xff]
    %v48 = vld [vmem:[%s1] sm:$0x1]
    %vm49 = vcmask 261120
    %v51 = vsel %vm49, %v48, 0
    %v54 = vsel %vm49, %v32, 0
    %v57 = vsel %vm49, %v33, 0
    %v60 = vsel %vm49, %v34, 0
    %v63 = vsel %vm49, %v35, 0
    %v66 = vsel %vm49, %v36, 0
    %v69 = vsel %vm49, %v37, 0
    %v72 = vsel %vm49, %v38, 0
    %v75 = vsel %vm49, %v39, 0
    %v78 = vsel %vm49, %v40, 0
    %v81 = vsel %vm49, %v41, 0
    %v84 = vsel %vm49, %v42, 0
    %v87 = vsel %vm49, %v43, 0
    %v90 = vsel %vm49, %v44, 0
    %v93 = vsel %vm49, %v45, 0
    %v96 = vsel %vm49, %v46, 0
    %v99 = vsel %vm49, %v47, 0
    %101 = vmatpush.xpose.msra.mxu0 %v99
    %102 = vmatpush.xpose.msra.mxu0 %v96
    %103 = vmatpush.xpose.msra.mxu0 %v93
    %104 = vmatpush.xpose.msra.mxu0 %v90
    %105 = vmatpush.xpose.msra.mxu0 %v87
    %106 = vmatpush.xpose.msra.mxu0 %v84
    %107 = vmatpush.xpose.msra.mxu0 %v81
    %108 = vmatpush.xpose.msra.mxu0 %v78
    %109 = vmatpush.xpose.msra.mxu0 %v75
    %110 = vmatpush.xpose.msra.mxu0 %v72
    %111 = vmatpush.xpose.msra.mxu0 %v69
    %112 = vmatpush.xpose.msra.mxu0 %v66
    %113 = vmatpush.xpose.msra.mxu0 %v63
    %114 = vmatpush.xpose.msra.mxu0 %v60
    %115 = vmatpush.xpose.msra.mxu0 %v57
    %116 = vmatpush.xpose.msra.mxu0 %v54
    %117 = vmatmul.f32.gmra.mxu0 %v51
    %v118 = vpop.f32.mrf.mxu0
    %v119 = vadd.f32 0.0, %v118
    %120 = vdwg.mxu0
    %p121 = scmp.eq.s32.totalorder 0, 0
    // Predicated region
    $region18: #{_dense_flat.1} parent=1 // pred_check
      %p122 = pneg %p121
    $region19: #{_dense_flat.1} parent=1 // pred_check_branch
      %124 = sbr.rel (%p122) target = $region21
    $region20: #{_dense_flat.1} parent=1 // pred_region
      %s125 = sld [smem:[#allocation2]]
      %v126 = vstv %s125
      %v127 = vadd.f32 %v119, %v126
      %128 = vst [vmem:[#allocation6] sm:$0x1] %v127
    $region21: #{_dense_flat.1} parent=1 // pred_fallthru
      _
    %p129 = scmp.gt.s32.totalorder 0, 0
    // Predicated region
    $region22: #{_dense_flat.1} parent=1 // pred_check
      %p130 = pneg %p129
    $region23: #{_dense_flat.1} parent=1 // pred_check_branch
      %132 = sbr.rel (%p130) target = $region25
    $region24: #{_dense_flat.1} parent=1 // pred_region
      %v133 = vld [vmem:[#allocation6] sm:$0x1]
      %v134 = vadd.f32 %v133, %v119
      %135 = vst [vmem:[#allocation6] sm:$0x1] %v134
    $region25: #{_dense_flat.1} parent=1 // pred_fallthru
      _
    // Predicated region
    $region26: #{_dense_flat.1} parent=1 // pred_check
      _
    $region27: #{_dense_flat.1} parent=1 // pred_check_branch
      %137 = sbr.rel (0) target = $region29
    $region28: #{_dense_flat.1} parent=1 // pred_region
      %139 = vsyncadd [#allocation5], 0
      %s141 = sshll.u32 [#allocation6], 4
      %s142 = int_to_ptr.vmem [resolvable:$true] %s141
      %s143 = sshll.u32 %s3, 4
      %s144 = int_to_ptr.hbm [resolvable:$true] %s143
      %146 = dma.vmem_to_hbm [thread:$0]  %s142, 16, %s144, [#allocation5]
    $region29: #{_dense_flat.1} parent=1 // pred_fallthru
      _
    // Predicated region
    $region30: #{_dense_flat.1} parent=1 // pred_check
      _
    $region31: #{_dense_flat.1} parent=1 // pred_check_branch
      %148 = sbr.rel (0) target = $region33
    $region32: #{_dense_flat.1} parent=1 // pred_region
      %150 = dma.done [#allocation5], 16
    $region33: #{_dense_flat.1} parent=1 // pred_fallthru
      _
    %151 = vsyncpa [#allocation4], 1
    %152 = vsyncpa [#allocation5], 1

</llo_original>
